<compile_context>
chip_gen: v5e
topology: v5e:2x2
jax: 0.10.0
libtpu: 0.0.40
codegen_flags: <defaults>
</compile_context>

<pallas_src>
import functools
import math

import jax
import jax.numpy as jnp
from jax.experimental import pallas as pl
from jax.experimental.pallas import tpu as pltpu


def _rmsnorm_affine_kernel(x_ref, w_ref, o_ref, *, eps, inv_dim):
    # Upcast to f32 (torch: x.float()), reduce over the lane axis (XLU),
    # rsqrt on the EUP, scale on the VPU.
    x = x_ref[...].astype(jnp.float32)
    ms = jnp.sum(x * x, axis=-1, keepdims=True) * inv_dim
    y = x * jax.lax.rsqrt(ms + eps)
    # torch semantics: downcast to x.dtype first (type_as), THEN multiply by weight.
    y = y.astype(o_ref.dtype).astype(jnp.float32) * w_ref[...]
    o_ref[...] = y.astype(o_ref.dtype)


def _rmsnorm_kernel(x_ref, o_ref, *, eps, inv_dim):
    x = x_ref[...].astype(jnp.float32)
    ms = jnp.sum(x * x, axis=-1, keepdims=True) * inv_dim
    y = x * jax.lax.rsqrt(ms + eps)
    o_ref[...] = y.astype(o_ref.dtype)


def _round_up(a, b):
    return (a + b - 1) // b * b


def _vmem_capacity_bytes():
    try:
        return int(pltpu.get_tpu_info().vmem_capacity_bytes)
    except Exception:
        return 64 * 1024 * 1024  # conservative (v7x per-TC)


def rmsnorm(x, weight=None, *, eps=1e-6, row_tile=None):
    """RMSNorm over the last dim of x. `weight` has shape (dim,) or is None."""
    orig_shape = x.shape
    dim = orig_shape[-1]
    rows = int(math.prod(orig_shape[:-1]))
    out_dtype = x.dtype

    x2d = x.reshape(rows, dim)

    x_bytes = jnp.dtype(x.dtype).itemsize
    o_bytes = jnp.dtype(out_dtype).itemsize
    sublane = max(8, 32 // x_bytes)  # 8 for f32, 16 for bf16, 32 for int8/fp8

    vmem_cap = _vmem_capacity_bytes()
    # Per-row VMEM cost: double-buffered in + out blocks, plus two f32 temporaries.
    bytes_per_row = dim * (2 * x_bytes + 2 * o_bytes + 8)

    if row_tile is None:
        # Footprint target per grid step, generation-aware (bigger on 128 MiB parts).
        if vmem_cap >= 100 * 1024 * 1024:      # v5e / v6e
            target_tile_bytes = 28 * 1024 * 1024
        else:                                   # v7x (64 MiB VMEM per TC)
            target_tile_bytes = 20 * 1024 * 1024
        row_tile = max(sublane,
                       (target_tile_bytes // bytes_per_row) // sublane * sublane)
    row_tile = max(sublane, (row_tile // sublane) * sublane)
    # Don't make the tile larger than the whole (sublane-rounded) problem.
    row_tile = min(row_tile, _round_up(rows, sublane))

    # Prefer an even number of grid steps so both v7x TensorCores split the work.
    n_steps = pl.cdiv(rows, row_tile)
    if n_steps > 1 and n_steps % 2 == 1:
        n_steps += 1
        row_tile = max(sublane, _round_up(pl.cdiv(rows, n_steps), sublane))

    grid = (pl.cdiv(rows, row_tile),)

    # VMEM limit from the actual footprint (+30% margin), capped to ~75% of physical.
    footprint = row_tile * bytes_per_row + dim * 4
    vmem_limit = int(footprint * 1.3) + (2 << 20)
    vmem_limit = max(vmem_limit, 32 << 20)
    vmem_limit = min(vmem_limit, int(vmem_cap * 0.75))

    compiler_params = pltpu.CompilerParams(
        dimension_semantics=("parallel",),  # shards rows across v7x's 2 TCs
        vmem_limit_bytes=vmem_limit,
    )

    # Full-extent last dim in the block (no 128-padding needed); partial last row
    # block is masked by Pallas.
    x_spec = pl.BlockSpec((row_tile, dim), lambda i: (i, 0))
    o_spec = pl.BlockSpec((row_tile, dim), lambda i: (i, 0))

    if weight is not None:
        w = weight.reshape(1, dim).astype(jnp.float32)
        out = pl.pallas_call(
            functools.partial(_rmsnorm_affine_kernel, eps=eps, inv_dim=1.0 / dim),
            out_shape=jax.ShapeDtypeStruct((rows, dim), out_dtype),
            grid_spec=pltpu.PrefetchScalarGridSpec(
                num_scalar_prefetch=0,
                grid=grid,
                in_specs=[x_spec, pl.BlockSpec((1, dim), lambda i: (0, 0))],
                out_specs=o_spec,
            ),
            compiler_params=compiler_params,
        )(x2d, w)
    else:
        out = pl.pallas_call(
            functools.partial(_rmsnorm_kernel, eps=eps, inv_dim=1.0 / dim),
            out_shape=jax.ShapeDtypeStruct((rows, dim), out_dtype),
            grid_spec=pltpu.PrefetchScalarGridSpec(
                num_scalar_prefetch=0,
                grid=grid,
                in_specs=[x_spec],
                out_specs=o_spec,
            ),
            compiler_params=compiler_params,
        )(x2d)

    return out.reshape(orig_shape)


if __name__ == "__main__":
    key = jax.random.PRNGKey(0)
    batch, seq, hidden = 2, 8, 32
    eps = 1e-6

    x = jax.random.normal(key, (batch, seq, hidden), dtype=jnp.float32)
    # elementwise_affine=True -> weight initialized to ones(dim) (deterministic)
    weight = jnp.ones((hidden,), dtype=jnp.float32)

    out = rmsnorm(x, weight, eps=eps)
    out = jax.block_until_ready(out)

    # Reference in plain JAX, mirroring the torch module exactly:
    #   output = (x.float() * rsqrt(mean(x^2,-1)+eps)).type_as(x) * weight
    xf = x.astype(jnp.float32)
    ref = xf * jax.lax.rsqrt(jnp.mean(xf * xf, axis=-1, keepdims=True) + eps)
    ref = ref.astype(x.dtype) * weight
    assert out.shape == x.shape and out.dtype == x.dtype
    assert jnp.allclose(out, ref, atol=1e-5, rtol=1e-5)

    # Also exercise the no-affine (elementwise_affine=False) variant.
    out_na = jax.block_until_ready(rmsnorm(x, None, eps=eps))
    ref_na = (xf * jax.lax.rsqrt(jnp.mean(xf * xf, axis=-1, keepdims=True) + eps)
              ).astype(x.dtype)
    assert jnp.allclose(out_na, ref_na, atol=1e-5, rtol=1e-5)

    print("KERNEL_OK")
</pallas_src>

<mosaic_0001>
module attributes {stable_mosaic.version = 11 : i64} {
  func.func @_rmsnorm_affine_kernel(%arg0: i32, %arg1: memref<16x32xf32, #tpu.memory_space<vmem>>, %arg2: memref<1x32xf32, #tpu.memory_space<vmem>>, %arg3: memref<16x32xf32, #tpu.memory_space<vmem>>) attributes {dimension_semantics = [#tpu.dimension_semantics<parallel>], iteration_bounds = array<i64: 1>, scalar_prefetch = 0 : i64, scratch_operands = 0 : i64, tpu.core_type = #tpu.core_type<tc>, window_params = [{transform_indices = @transform_0, window_bounds = array<i64: 16, 32>}, {pipeline_mode = #tpu.pipeline_mode<synchronous>, transform_indices = @transform_1, window_bounds = array<i64: 1, 32>}, {transform_indices = @transform_2, window_bounds = array<i64: 16, 32>}]} {
    %c0 = arith.constant 0 : index
    %c0_0 = arith.constant 0 : index
    %0 = vector.load %arg1[%c0, %c0_0] : memref<16x32xf32, #tpu.memory_space<vmem>>, vector<16x32xf32>
    %1 = arith.mulf %0, %0 : vector<16x32xf32>
    %cst = arith.constant dense<0.000000e+00> : vector<16xf32>
    %2 = vector.multi_reduction <add>, %1, %cst [1] : vector<16x32xf32> to vector<16xf32>
    %3 = vector.shape_cast %2 : vector<16xf32> to vector<16x1xf32>
    %cst_1 = arith.constant 3.125000e-02 : f32
    %4 = vector.broadcast %cst_1 : f32 to vector<16x1xf32>
    %5 = arith.mulf %3, %4 : vector<16x1xf32>
    %cst_2 = arith.constant 9.99999997E-7 : f32
    %6 = vector.broadcast %cst_2 : f32 to vector<16x1xf32>
    %7 = arith.addf %5, %6 : vector<16x1xf32>
    %8 = math.rsqrt %7 : vector<16x1xf32>
    %9 = vector.broadcast %8 : vector<16x1xf32> to vector<16x32xf32>
    %10 = arith.mulf %0, %9 : vector<16x32xf32>
    %c0_3 = arith.constant 0 : index
    %c0_4 = arith.constant 0 : index
    %11 = vector.load %arg2[%c0_3, %c0_4] : memref<1x32xf32, #tpu.memory_space<vmem>>, vector<1x32xf32>
    %12 = vector.broadcast %11 : vector<1x32xf32> to vector<16x32xf32>
    %13 = arith.mulf %10, %12 : vector<16x32xf32>
    %c0_5 = arith.constant 0 : index
    %c0_6 = arith.constant 0 : index
    %14 = vector.load %arg3[%c0_5, %c0_6] : memref<16x32xf32, #tpu.memory_space<vmem>>, vector<16x32xf32>
    tpu.vector_store %arg3[%c0_5, %c0_6], %13 {strides = array<i32>} : memref<16x32xf32, #tpu.memory_space<vmem>>, vector<16x32xf32>,
    return
  }
  func.func @transform_0(%arg0: i32) -> (i32, i32) {
    %c0_i32 = arith.constant 0 : i32
    %c0_i32_0 = arith.constant 0 : i32
    return %arg0, %c0_i32 : i32, i32
  }
  func.func @transform_1(%arg0: i32) -> (i32, i32) {
    %c0_i32 = arith.constant 0 : i32
    %c0_i32_0 = arith.constant 0 : i32
    %c0_i32_1 = arith.constant 0 : i32
    return %c0_i32, %c0_i32_0 : i32, i32
  }
  func.func @transform_2(%arg0: i32) -> (i32, i32) {
    %c0_i32 = arith.constant 0 : i32
    %c0_i32_0 = arith.constant 0 : i32
    return %arg0, %c0_i32 : i32, i32
  }
}

</mosaic_0001>

<llo_original>
// kernel: tpu_custom_call.1
$region0: #{tpu_custom_call.1}
  #allocation0 [shape = 'u32[]', space=smem, size = 0x4, offset = 0x4, fixed_abs, tag = 'smem constant byte address 0x4 - core index']
  #allocation1 [shape = 'u32[72,128]{1,0:T(1,128)}', space=vmem, size = 0x9000, scoped, tag = 'internal scratch']
  %s0 = inlined_call_operand.hbm [shape: f32[16,32], index: 0, kind: input, shape index: {}]
  %s1 = inlined_call_operand.hbm [shape: f32[1,32], index: 1, kind: input, shape index: {}]
  %s2 = inlined_call_operand.hbm [shape: f32[16,32], index: 2, kind: output, shape index: {}]
  %s3 = sld [smem:[#allocation0]]
  $region26: #{tpu_custom_call.1} parent=0
    _
  %s5 = ssub.s32 1, %s3
  %s6 = scalar_select 0, %s5, %s3
  $region1: #{tpu_custom_call.1} parent=0
    #allocation2 [shape = 'u8[8192]{0}', space=vmem, size = 0x2000, scoped, tag = 'input window, operand 0, single buffered']
    #allocation3 [shape = 's32[1]{0}', space=sflag, size = 0x4, scoped, tag = 'scoped memory for tpu_custom_call.1']
    #allocation4 [shape = 's32[1]{0}', space=sflag, size = 0x4, scoped, tag = 'scoped memory for tpu_custom_call.1']
    #allocation5 [shape = 'u8[512]{0}', space=vmem, size = 0x400, scoped, tag = 'input window, operand 1, single buffered']
    #allocation6 [shape = 's32[1]{0}', space=sflag, size = 0x4, scoped, tag = 'scoped memory for tpu_custom_call.1']
    #allocation7 [shape = 'u8[8192]{0}', space=vmem, size = 0x2000, scoped, tag = 'output window, operand 0, single buffered']
    %7 = vsyncpa [#allocation3], 0
    %8 = vsyncpa [#allocation6], 0
    %9 = vsyncpa [#allocation4], 0
    // Predicated region
    $region2: #{tpu_custom_call.1} parent=1 // pred_check
      _
    $region3: #{tpu_custom_call.1} parent=1 // pred_check_branch
      %11 = sbr.rel (0) target = $region5
    $region4: #{tpu_custom_call.1} parent=1 // pred_region
      %13 = vsyncadd [#allocation3], 0
      %s14 = sshll.u32 %s0, 4
      %s15 = int_to_ptr.hbm [resolvable:$true] %s14
      %s16 = sshll.u32 [#allocation2], 4
      %s17 = int_to_ptr.vmem [resolvable:$true] %s16
      %22 = dma.hbm_to_vmem [thread:$0]  %s15, 256, %s17, [#allocation3], 128, 128, 8
    $region5: #{tpu_custom_call.1} parent=1 // pred_fallthru
      _
    // Predicated region
    $region6: #{tpu_custom_call.1} parent=1 // pred_check
      _
    $region7: #{tpu_custom_call.1} parent=1 // pred_check_branch
      %24 = sbr.rel (0) target = $region9
    $region8: #{tpu_custom_call.1} parent=1 // pred_region
      %26 = vsyncadd [#allocation6], 0
      %s28 = sshll.u32 %s1, 4
      %s29 = int_to_ptr.hbm [resolvable:$true] %s28
      %s30 = sshll.u32 [#allocation5], 4
      %s31 = int_to_ptr.vmem [resolvable:$true] %s30
      %33 = dma.hbm_to_vmem [thread:$0]  %s29, 16, %s31, [#allocation6]
    $region9: #{tpu_custom_call.1} parent=1 // pred_fallthru
      _
    // Predicated region
    $region10: #{tpu_custom_call.1} parent=1 // pred_check
      _
    $region11: #{tpu_custom_call.1} parent=1 // pred_check_branch
      %35 = sbr.rel (0) target = $region13
    $region12: #{tpu_custom_call.1} parent=1 // pred_region
      %37 = dma.done [#allocation3], 256
    $region13: #{tpu_custom_call.1} parent=1 // pred_fallthru
      _
    // Predicated region
    $region14: #{tpu_custom_call.1} parent=1 // pred_check
      _
    $region15: #{tpu_custom_call.1} parent=1 // pred_check_branch
      %39 = sbr.rel (0) target = $region17
    $region16: #{tpu_custom_call.1} parent=1 // pred_region
      %41 = dma.done [#allocation6], 16
    $region17: #{tpu_custom_call.1} parent=1 // pred_fallthru
      _
    %v42 = vld [vmem:[#allocation2] sm:$0xff]
    %v43 = vld [vmem:[#allocation2 + $0x8] sm:$0xff]
    %v44 = vmul.f32 %v42, %v42
    %v45 = vmul.f32 %v43, %v43
    %vm46 = vcmask 261120
    %v47 = vsel %vm46, %v44, 0.0
    %48 = vadd.xlane.f32.xlu0 %v47
    %v49 = vpop.xlane.xlu0 %48
    %v50 = vsel %vm46, %v45, 0.0
    %51 = vadd.xlane.f32.xlu0 %v50
    %v52 = vpop.xlane.xlu0 %51
    %v53 = vmul.f32 %v49, 0.03125
    %v54 = vmul.f32 %v52, 0.03125
    %v55 = vadd.f32 %v53, 1e-06
    %v56 = vadd.f32 %v54, 1e-06
    %v57 = vrsqrt.pop %v55
    %v58 = vmul.f32 %v57, %v55
    %v59 = vmul.f32 %v58, %v57
    %v60 = vmul.f32 0.5, %v59
    %v61 = vsub.f32 1.5, %v60
    %v62 = vmul.f32 %v57, %v61
    %vm63 = vweird.f32 %v55
    %vm64 = vweird.f32 %v57
    %vm65 = vmor %vm63, %vm64
    %v66 = vsel %vm65, %v57, %v62
    %v67 = vrsqrt.pop %v56
    %v68 = vmul.f32 %v67, %v56
    %v69 = vmul.f32 %v68, %v67
    %v70 = vmul.f32 0.5, %v69
    %v71 = vsub.f32 1.5, %v70
    %v72 = vmul.f32 %v67, %v71
    %vm73 = vweird.f32 %v56
    %vm74 = vweird.f32 %v67
    %vm75 = vmor %vm73, %vm74
    %v76 = vsel %vm75, %v67, %v72
    %v77 = vmul.f32 %v42, %v66
    %v78 = vmul.f32 %v43, %v76
    %v79 = vld [vmem:[#allocation5] sm:$0x1]
    %v81 = vperm.slane %v79, 0
    %v83 = vmul.f32 %v77, %v81
    %v84 = vmul.f32 %v78, %v81
    %85 = vst.msk [vmem:[#allocation7] sm:$0xff] %vm46, %v83
    %86 = vst.msk [vmem:[#allocation7 + $0x8] sm:$0xff] %vm46, %v84
    // Predicated region
    $region18: #{tpu_custom_call.1} parent=1 // pred_check
      _
    $region19: #{tpu_custom_call.1} parent=1 // pred_check_branch
      %88 = sbr.rel (0) target = $region21
    $region20: #{tpu_custom_call.1} parent=1 // pred_region
      %90 = vsyncadd [#allocation4], 0
      %s91 = sshll.u32 [#allocation7], 4
      %s92 = int_to_ptr.vmem [resolvable:$true] %s91
      %s93 = sshll.u32 %s2, 4
      %s94 = int_to_ptr.hbm [resolvable:$true] %s93
      %99 = dma.vmem_to_hbm [thread:$0]  %s92, 256, %s94, [#allocation4], 128, 128, 8
    $region21: #{tpu_custom_call.1} parent=1 // pred_fallthru
      _
    // Predicated region
    $region22: #{tpu_custom_call.1} parent=1 // pred_check
      _
    $region23: #{tpu_custom_call.1} parent=1 // pred_check_branch
      %101 = sbr.rel (0) target = $region25
    $region24: #{tpu_custom_call.1} parent=1 // pred_region
      %103 = dma.done [#allocation4], 256
    $region25: #{tpu_custom_call.1} parent=1 // pred_fallthru
      _
    %104 = vsyncpa [#allocation3], 1
    %105 = vsyncpa [#allocation6], 1
    %106 = vsyncpa [#allocation4], 1

</llo_original>
